<compile_context>
chip_gen: v7x
topology: tpu7x:2x2x1
jax: 0.10.0
libtpu: 0.0.40
codegen_flags: <defaults>
</compile_context>

<pallas_src>
import functools

import jax
import jax.numpy as jnp
import numpy as np
from jax import lax
from jax.experimental import pallas as pl
from jax.experimental.pallas import tpu as pltpu


def _round_up(n, m):
    return ((n + m - 1) // m) * m


# ----------------------------------------------------------------------------
# Fused kernel: fc1 (lane-dense) -> MaxOut(4) via lane rolls -> [fc21|exp(fc22)]
# ----------------------------------------------------------------------------
def inference_kernel(x_ref, w1_ref, b1_ref, w2_ref, b2_ref, out_ref, *, z_dim):
    # x_ref : (TB, input_dim)        native dtype, cast to operand dtype here
    # w1_ref: (input_dim, hidden)    column k*hq + i holds fc1 neuron 4*i + k
    # b1_ref: (1, hidden)  f32       same permutation
    # w2_ref: (hidden, OUT)          rows [0:hq] = [W21.T | W22.T], rest zero
    # b2_ref: (1, OUT)     f32       [b21 | b22 | 0...]
    # out_ref: (TB, OUT)   f32       [z_loc | z_scale | padding]
    hidden = w1_ref.shape[1]
    hq = hidden // 4
    op_dtype = w1_ref.dtype

    x = x_ref[...].astype(op_dtype)
    # Single lane-dense fc1 matmul (N = hidden_dim = 4*hq), f32 accumulation.
    h = jnp.dot(x, w1_ref[...], preferred_element_type=jnp.float32) + b1_ref[...]

    # MaxOut over the four hq-wide lane chunks: max of h with its cyclic lane
    # rolls by hq, 2hq, 3hq covers all four group members in every lane.
    # (Correct because the rolled axis extent is exactly hidden_dim == 4*hq.)
    m = h
    for s in (hq, 2 * hq, 3 * hq):
        m = jnp.maximum(m, jnp.roll(h, shift=s, axis=1))

    # Fused fc21/fc22: feed the full 128-lane m (rows hq:hidden of w2 are zero,
    # so the replicated group-max copies contribute nothing) -> lane-dense out.
    y = jnp.dot(m.astype(op_dtype), w2_ref[...],
                preferred_element_type=jnp.float32) + b2_ref[...]

    # exp() only on the fc22 half, selected with a lane mask (no lane slicing).
    # NOTE: both branches are evaluated (fine for forward; would need care if
    # this kernel were ever differentiated).
    lane = lax.broadcasted_iota(jnp.int32, y.shape, dimension=1)
    out_ref[...] = jnp.where(lane < z_dim, y, jnp.exp(y))


# ----------------------------------------------------------------------------
# One-time parameter packing (hoisted out of the per-call forward)
# ----------------------------------------------------------------------------
def pack_params(params, input_dim, hidden_dim, z_dim, compute_dtype=jnp.bfloat16):
    """Re-layout PyTorch-style Linear params for the lane-dense fused kernel."""
    assert hidden_dim % 4 == 0, "MaxOut window 4 requires hidden_dim % 4 == 0"
    W1, b1, W21, b21, W22, b22 = params
    hq = hidden_dim // 4
    op = jnp.dtype(compute_dtype)

    # Column k*hq + i of W1p is fc1 neuron 4*i + k (lane-dense MaxOut groups).
    W1p = (jnp.asarray(W1, jnp.float32)
           .reshape(hq, 4, input_dim)
           .transpose(1, 0, 2)
           .reshape(hidden_dim, input_dim).T).astype(op)          # (input, hidden)
    b1p = jnp.asarray(b1, jnp.float32).reshape(hq, 4).T.reshape(1, hidden_dim)

    # fc21/fc22 fused + padded to a full lane-dense slab.
    out_w = _round_up(2 * z_dim, 128)
    W2core = jnp.concatenate([jnp.asarray(W21, jnp.float32).T,
                              jnp.asarray(W22, jnp.float32).T], axis=1)  # (hq, 2z)
    W2p = (jnp.zeros((hidden_dim, out_w), jnp.float32)
           .at[:hq, :2 * z_dim].set(W2core)).astype(op)           # (hidden, OUT)
    b2core = jnp.concatenate([jnp.asarray(b21, jnp.float32),
                              jnp.asarray(b22, jnp.float32)])
    b2p = jnp.zeros((1, out_w), jnp.float32).at[0, :2 * z_dim].set(b2core)
    return W1p, b1p, W2p, b2p


# ----------------------------------------------------------------------------
# Forward wrapper
# ----------------------------------------------------------------------------
@functools.partial(jax.jit, static_argnames=("input_dim", "hidden_dim", "z_dim"))
def inference_network_forward(x, packed_params, *, input_dim, hidden_dim, z_dim):
    """Returns (z_loc, z_scale) — the Normal(loc, scale) parameters."""
    W1p, b1p, W2p, b2p = packed_params
    out_w = W2p.shape[1]

    # Metadata-only reshape (contiguous input); NO astype / pad passes over x.
    xf = x.reshape(-1, input_dim)
    B = xf.shape[0]

    # Batch tile: large (amortize ~0.35 us/step, mem-bound efficiency), but aim
    # for >=2 grid steps so v7x's two TensorCores both get work.  Ragged last
    # tile is handled by Pallas partial blocks (no jnp.pad HBM copy).
    TB_CAP = 1024
    TB = max(8, min(TB_CAP, _round_up(pl.cdiv(_round_up(B, 8), 2), 8)))
    grid = (pl.cdiv(B, TB),)

    cost = pl.CostEstimate(
        flops=2 * B * input_dim * hidden_dim + 2 * B * hidden_dim * out_w,
        transcendentals=B * out_w,
        bytes_accessed=(xf.size * xf.dtype.itemsize
                        + W1p.size * W1p.dtype.itemsize
                        + W2p.size * W2p.dtype.itemsize
                        + (b1p.size + b2p.size) * 4
                        + B * out_w * 4),
    )

    out = pl.pallas_call(
        functools.partial(inference_kernel, z_dim=z_dim),
        out_shape=jax.ShapeDtypeStruct((B, out_w), jnp.float32),
        grid=grid,
        in_specs=[
            pl.BlockSpec((TB, input_dim), lambda i: (i, 0)),           # x tile (streamed)
            pl.BlockSpec((input_dim, hidden_dim), lambda i: (0, 0)),   # W1 (resident)
            pl.BlockSpec((1, hidden_dim), lambda i: (0, 0)),           # b1
            pl.BlockSpec((hidden_dim, out_w), lambda i: (0, 0)),       # [W21|W22] padded
            pl.BlockSpec((1, out_w), lambda i: (0, 0)),                # [b21|b22] padded
        ],
        out_specs=pl.BlockSpec((TB, out_w), lambda i: (i, 0)),         # lane-dense slab
        compiler_params=pltpu.CompilerParams(
            dimension_semantics=("parallel",),
            vmem_limit_bytes=32 * 1024 * 1024),
        cost_estimate=cost,
        # TODO(synk): optionally set pipeline_mode=pl.Buffered(3) on the x spec
        # if profiling shows exposed DMA gaps between grid steps.
    )(xf, W1p, b1p, W2p, b2p)

    z_loc = out[:, :z_dim]
    z_scale = out[:, z_dim:2 * z_dim]
    return z_loc, z_scale


# ----------------------------------------------------------------------------
# Deterministic parameter init (matches PyTorch nn.Linear shapes & init scale)
# ----------------------------------------------------------------------------
def init_params(key, input_dim, hidden_dim, z_dim):
    hq = hidden_dim // 4
    ks = jax.random.split(key, 6)

    def linear_init(kw, kb, fan_in, fan_out):
        bound = 1.0 / np.sqrt(fan_in)
        W = jax.random.uniform(kw, (fan_out, fan_in), jnp.float32, -bound, bound)
        b = jax.random.uniform(kb, (fan_out,), jnp.float32, -bound, bound)
        return W, b

    W1, b1 = linear_init(ks[0], ks[1], input_dim, hidden_dim)   # fc1
    W21, b21 = linear_init(ks[2], ks[3], hq, z_dim)             # fc21
    W22, b22 = linear_init(ks[4], ks[5], hq, z_dim)             # fc22
    return (W1, b1, W21, b21, W22, b22)


# ----------------------------------------------------------------------------
# Pure-JAX reference (mirrors the PyTorch forward exactly)
# ----------------------------------------------------------------------------
def reference_forward(x, params, input_dim, hidden_dim, z_dim):
    W1, b1, W21, b21, W22, b22 = params
    xf = x.reshape(-1, input_dim)
    h = xf @ W1.T + b1                                      # (B, hidden)
    h = h.reshape(h.shape[0], hidden_dim // 4, 4).max(-1)   # MaxOut window 4
    z_loc = h @ W21.T + b21
    z_scale = jnp.exp(h @ W22.T + b22)
    return z_loc, z_scale


if __name__ == "__main__":
    # Small shapes consistent with the module: image (B=2, C=4, H=16, W=16)
    #   -> input_dim = 4*16*16 = 1024, hidden_dim = 128, z_dim = 16
    B, C, H, W = 2, 4, 16, 16
    input_dim = C * H * W
    hidden_dim = 128
    z_dim = 16

    key = jax.random.PRNGKey(0)
    kx, kp = jax.random.split(key)
    x = jax.random.normal(kx, (B, C, H, W), jnp.float32)
    params = init_params(kp, input_dim, hidden_dim, z_dim)

    # TODO(synk): the PyTorch module returns dist.Normal(loc, scale); here we
    # return the (loc, scale) tensors that parameterize it.
    ref_loc, ref_scale = reference_forward(x, params, input_dim, hidden_dim, z_dim)

    # --- f32 operands: strict correctness check -----------------------------
    packed_f32 = pack_params(params, input_dim, hidden_dim, z_dim,
                             compute_dtype=jnp.float32)
    packed_f32 = jax.block_until_ready(packed_f32)
    loc32, scale32 = inference_network_forward(
        x, packed_f32, input_dim=input_dim, hidden_dim=hidden_dim, z_dim=z_dim)
    jax.block_until_ready((loc32, scale32))
    np.testing.assert_allclose(np.asarray(loc32), np.asarray(ref_loc),
                               rtol=1e-5, atol=1e-5)
    np.testing.assert_allclose(np.asarray(scale32), np.asarray(ref_scale),
                               rtol=1e-5, atol=1e-5)

    # --- bf16 operands (default fast path): f32 accumulation, looser tol ----
    packed_bf16 = pack_params(params, input_dim, hidden_dim, z_dim)
    packed_bf16 = jax.block_until_ready(packed_bf16)
    loc_bf, scale_bf = inference_network_forward(
        x, packed_bf16, input_dim=input_dim, hidden_dim=hidden_dim, z_dim=z_dim)
    jax.block_until_ready((loc_bf, scale_bf))
    np.testing.assert_allclose(np.asarray(loc_bf), np.asarray(ref_loc),
                               rtol=3e-2, atol=3e-2)
    np.testing.assert_allclose(np.asarray(scale_bf), np.asarray(ref_scale),
                               rtol=3e-2, atol=3e-2)

    print("KERNEL_OK")
</pallas_src>

<mosaic_0001>
module attributes {stable_mosaic.version = 11 : i64} {
  func.func @inference_kernel(%arg0: i32, %arg1: memref<8x1024xf32, #tpu.memory_space<vmem>>, %arg2: memref<1024x128xf32, #tpu.memory_space<vmem>>, %arg3: memref<1x128xf32, #tpu.memory_space<vmem>>, %arg4: memref<128x128xf32, #tpu.memory_space<vmem>>, %arg5: memref<1x128xf32, #tpu.memory_space<vmem>>, %arg6: memref<8x128xf32, #tpu.memory_space<vmem>>) attributes {dimension_semantics = [#tpu.dimension_semantics<parallel>], iteration_bounds = array<i64: 1>, scalar_prefetch = 0 : i64, scratch_operands = 0 : i64, tpu.core_type = #tpu.core_type<tc>, window_params = [{transform_indices = @transform_0, window_bounds = array<i64: 8, 1024>}, {pipeline_mode = #tpu.pipeline_mode<synchronous>, transform_indices = @transform_1, window_bounds = array<i64: 1024, 128>}, {pipeline_mode = #tpu.pipeline_mode<synchronous>, transform_indices = @transform_2, window_bounds = array<i64: 1, 128>}, {pipeline_mode = #tpu.pipeline_mode<synchronous>, transform_indices = @transform_3, window_bounds = array<i64: 128, 128>}, {pipeline_mode = #tpu.pipeline_mode<synchronous>, transform_indices = @transform_4, window_bounds = array<i64: 1, 128>}, {transform_indices = @transform_5, window_bounds = array<i64: 8, 128>}]} {
    %c0 = arith.constant 0 : index
    %c0_0 = arith.constant 0 : index
    %0 = vector.load %arg1[%c0, %c0_0] : memref<8x1024xf32, #tpu.memory_space<vmem>>, vector<8x1024xf32>
    %c0_1 = arith.constant 0 : index
    %c0_2 = arith.constant 0 : index
    %1 = vector.load %arg2[%c0_1, %c0_2] : memref<1024x128xf32, #tpu.memory_space<vmem>>, vector<1024x128xf32>
    %cst = arith.constant dense<0.000000e+00> : vector<8x128xf32>
    %2 = tpu.matmul %0, %1, %cst {dimension_numbers = #tpu.dot_dimension_numbers<[1], [0], [0], [1], [0, 0, 1, 1], [], []>} : vector<8x1024xf32>, vector<1024x128xf32>, vector<8x128xf32> -> vector<8x128xf32>
    %c0_3 = arith.constant 0 : index
    %c0_4 = arith.constant 0 : index
    %3 = vector.load %arg3[%c0_3, %c0_4] : memref<1x128xf32, #tpu.memory_space<vmem>>, vector<1x128xf32>
    %4 = vector.broadcast %3 : vector<1x128xf32> to vector<8x128xf32>
    %5 = arith.addf %2, %4 : vector<8x128xf32>
    %6 = vector.extract_strided_slice %5 {offsets = [0, 96], sizes = [8, 32], strides = [1, 1]} : vector<8x128xf32> to vector<8x32xf32>
    %7 = vector.extract_strided_slice %5 {offsets = [0, 0], sizes = [8, 96], strides = [1, 1]} : vector<8x128xf32> to vector<8x96xf32>
    %8 = tpu.concatenate %6, %7 in 1 : vector<8x32xf32>, vector<8x96xf32> -> vector<8x128xf32>
    %9 = arith.maximumf %5, %8 : vector<8x128xf32>
    %10 = vector.extract_strided_slice %5 {offsets = [0, 64], sizes = [8, 64], strides = [1, 1]} : vector<8x128xf32> to vector<8x64xf32>
    %11 = vector.extract_strided_slice %5 {offsets = [0, 0], sizes = [8, 64], strides = [1, 1]} : vector<8x128xf32> to vector<8x64xf32>
    %12 = tpu.concatenate %10, %11 in 1 : vector<8x64xf32>, vector<8x64xf32> -> vector<8x128xf32>
    %13 = arith.maximumf %9, %12 : vector<8x128xf32>
    %14 = vector.extract_strided_slice %5 {offsets = [0, 32], sizes = [8, 96], strides = [1, 1]} : vector<8x128xf32> to vector<8x96xf32>
    %15 = vector.extract_strided_slice %5 {offsets = [0, 0], sizes = [8, 32], strides = [1, 1]} : vector<8x128xf32> to vector<8x32xf32>
    %16 = tpu.concatenate %14, %15 in 1 : vector<8x96xf32>, vector<8x32xf32> -> vector<8x128xf32>
    %17 = arith.maximumf %13, %16 : vector<8x128xf32>
    %c0_5 = arith.constant 0 : index
    %c0_6 = arith.constant 0 : index
    %18 = vector.load %arg4[%c0_5, %c0_6] : memref<128x128xf32, #tpu.memory_space<vmem>>, vector<128x128xf32>
    %cst_7 = arith.constant dense<0.000000e+00> : vector<8x128xf32>
    %19 = tpu.matmul %17, %18, %cst_7 {dimension_numbers = #tpu.dot_dimension_numbers<[1], [0], [0], [1], [0, 0, 1, 1], [], []>} : vector<8x128xf32>, vector<128x128xf32>, vector<8x128xf32> -> vector<8x128xf32>
    %c0_8 = arith.constant 0 : index
    %c0_9 = arith.constant 0 : index
    %20 = vector.load %arg5[%c0_8, %c0_9] : memref<1x128xf32, #tpu.memory_space<vmem>>, vector<1x128xf32>
    %21 = vector.broadcast %20 : vector<1x128xf32> to vector<8x128xf32>
    %22 = arith.addf %19, %21 : vector<8x128xf32>
    %23 = tpu.iota {dimensions = array<i32: 1>} : vector<8x128xi32>
    %c16_i32 = arith.constant 16 : i32
    %24 = vector.broadcast %c16_i32 : i32 to vector<8x128xi32>
    %25 = arith.cmpi slt, %23, %24 : vector<8x128xi32>
    %26 = math.exp %22 : vector<8x128xf32>
    %27 = arith.select %25, %22, %26 : vector<8x128xi1>, vector<8x128xf32>
    %c0_10 = arith.constant 0 : index
    %c0_11 = arith.constant 0 : index
    %28 = vector.load %arg6[%c0_10, %c0_11] : memref<8x128xf32, #tpu.memory_space<vmem>>, vector<8x128xf32>
    tpu.vector_store %arg6[%c0_10, %c0_11], %27 {strides = array<i32>} : memref<8x128xf32, #tpu.memory_space<vmem>>, vector<8x128xf32>,
    return
  }
  func.func @transform_0(%arg0: i32) -> (i32, i32) {
    %c0_i32 = arith.constant 0 : i32
    %c0_i32_0 = arith.constant 0 : i32
    return %arg0, %c0_i32 : i32, i32
  }
  func.func @transform_1(%arg0: i32) -> (i32, i32) {
    %c0_i32 = arith.constant 0 : i32
    %c0_i32_0 = arith.constant 0 : i32
    %c0_i32_1 = arith.constant 0 : i32
    return %c0_i32, %c0_i32_0 : i32, i32
  }
  func.func @transform_2(%arg0: i32) -> (i32, i32) {
    %c0_i32 = arith.constant 0 : i32
    %c0_i32_0 = arith.constant 0 : i32
    %c0_i32_1 = arith.constant 0 : i32
    return %c0_i32, %c0_i32_0 : i32, i32
  }
  func.func @transform_3(%arg0: i32) -> (i32, i32) {
    %c0_i32 = arith.constant 0 : i32
    %c0_i32_0 = arith.constant 0 : i32
    %c0_i32_1 = arith.constant 0 : i32
    return %c0_i32, %c0_i32_0 : i32, i32
  }
  func.func @transform_4(%arg0: i32) -> (i32, i32) {
    %c0_i32 = arith.constant 0 : i32
    %c0_i32_0 = arith.constant 0 : i32
    %c0_i32_1 = arith.constant 0 : i32
    return %c0_i32, %c0_i32_0 : i32, i32
  }
  func.func @transform_5(%arg0: i32) -> (i32, i32) {
    %c0_i32 = arith.constant 0 : i32
    %c0_i32_0 = arith.constant 0 : i32
    return %arg0, %c0_i32 : i32, i32
  }
}

</mosaic_0001>

<llo_original>
// kernel: inference_network_forward.1
$region0: #{inference_network_forward.1}
  #allocation0 [shape = 'u32[]', space=smem, size = 0x4, offset = 0x4, fixed_abs, tag = 'smem constant byte address 0x4 - core index']
  #allocation1 [shape = 'u32[144,128]{1,0:T(1,128)}', space=vmem, size = 0x12000, scoped, tag = 'internal scratch']
  %s0 = inlined_call_operand.vmem [shape: f32[2,1024], index: 0, kind: input, shape index: {}]
  %s1 = inlined_call_operand.hbm [shape: f32[1024,128], index: 1, kind: input, shape index: {}]
  %s2 = inlined_call_operand.vmem [shape: f32[1,128], index: 2, kind: input, shape index: {}]
  %s3 = inlined_call_operand.vmem [shape: f32[128,128], index: 3, kind: input, shape index: {}]
  %s4 = inlined_call_operand.vmem [shape: f32[1,128], index: 4, kind: input, shape index: {}]
  %s5 = inlined_call_operand.vmem [shape: f32[2,128], index: 5, kind: output, shape index: {}]
  %s6 = sld [smem:[#allocation0]]
  $region64: #{inference_network_forward.1} parent=0
    _
  %s8 = ssub.s32 1, %s6
  %s9 = scalar_select 0, %s8, %s6
  $region1: #{inference_network_forward.1} parent=0
    #allocation2 [shape = 'u8[524288]{0}', space=vmem, size = 0x80000, scoped, tag = 'input window, operand 1, single buffered']
    #allocation3 [shape = 's32[1]{0}', space=sflag, size = 0x4, scoped, tag = 'scoped memory for inference_network_forward.1']
    #allocation4 [shape = 'u8[4096]{0}', space=vmem, size = 0x1000, scoped, tag = 'output window, operand 0, single buffered']
    %10 = vsyncpa [#allocation3], 0
    // Predicated region
    $region2: #{inference_network_forward.1} parent=1 // pred_check
      _
    $region3: #{inference_network_forward.1} parent=1 // pred_check_branch
      %12 = sbr.rel (0) target = $region5
    $region4: #{inference_network_forward.1} parent=1 // pred_region
      _
    $region5: #{inference_network_forward.1} parent=1 // pred_fallthru
      _
    // Predicated region
    $region6: #{inference_network_forward.1} parent=1 // pred_check
      _
    $region7: #{inference_network_forward.1} parent=1 // pred_check_branch
      %14 = sbr.rel (0) target = $region9
    $region8: #{inference_network_forward.1} parent=1 // pred_region
      %s16 = ssub.s32 16384, 16384
      %17 = vsyncadd [#allocation3], %s16
      %s18 = sshll.u32 [#allocation2], 4
      %s19 = int_to_ptr.vmem [resolvable:$true] %s18
      %24 = dma.hbm_to_vmem [thread:$0]  %s1, 16384, %s19, [#allocation3], 128, 128, 8
    $region9: #{inference_network_forward.1} parent=1 // pred_fallthru
      _
    // Predicated region
    $region10: #{inference_network_forward.1} parent=1 // pred_check
      _
    $region11: #{inference_network_forward.1} parent=1 // pred_check_branch
      %26 = sbr.rel (0) target = $region13
    $region12: #{inference_network_forward.1} parent=1 // pred_region
      _
    $region13: #{inference_network_forward.1} parent=1 // pred_fallthru
      _
    // Predicated region
    $region14: #{inference_network_forward.1} parent=1 // pred_check
      _
    $region15: #{inference_network_forward.1} parent=1 // pred_check_branch
      %28 = sbr.rel (0) target = $region17
    $region16: #{inference_network_forward.1} parent=1 // pred_region
      _
    $region17: #{inference_network_forward.1} parent=1 // pred_fallthru
      _
    // Predicated region
    $region18: #{inference_network_forward.1} parent=1 // pred_check
      _
    $region19: #{inference_network_forward.1} parent=1 // pred_check_branch
      %30 = sbr.rel (0) target = $region21
    $region20: #{inference_network_forward.1} parent=1 // pred_region
      _
    $region21: #{inference_network_forward.1} parent=1 // pred_fallthru
      _
    // Predicated region
    $region22: #{inference_network_forward.1} parent=1 // pred_check
      _
    $region23: #{inference_network_forward.1} parent=1 // pred_check_branch
      %32 = sbr.rel (0) target = $region25
    $region24: #{inference_network_forward.1} parent=1 // pred_region
      %33 = dma.done [#allocation3], 16384
    $region25: #{inference_network_forward.1} parent=1 // pred_fallthru
      _
    %v34 = vld [vmem:[%s0] sm:$0xff]
    %v35 = vld [vmem:[%s0 + $0x8] sm:$0xff]
    %v36 = vld [vmem:[%s0 + $0x10] sm:$0xff]
    %v37 = vld [vmem:[%s0 + $0x18] sm:$0xff]
    %v38 = vld [vmem:[%s0 + $0x20] sm:$0xff]
    %v39 = vld [vmem:[%s0 + $0x28] sm:$0xff]
    %v40 = vld [vmem:[%s0 + $0x30] sm:$0xff]
    %v41 = vld [vmem:[%s0 + $0x38] sm:$0xff]
    %v42 = vld [vmem:[#allocation2] sm:$0xff]
    %v43 = vld [vmem:[#allocation2 + $0x8] sm:$0xff]
    %v44 = vld [vmem:[#allocation2 + $0x10] sm:$0xff]
    %v45 = vld [vmem:[#allocation2 + $0x18] sm:$0xff]
    %v46 = vld [vmem:[#allocation2 + $0x20] sm:$0xff]
    %v47 = vld [vmem:[#allocation2 + $0x28] sm:$0xff]
    %v48 = vld [vmem:[#allocation2 + $0x30] sm:$0xff]
    %v49 = vld [vmem:[#allocation2 + $0x38] sm:$0xff]
    %v50 = vld [vmem:[#allocation2 + $0x40] sm:$0xff]
    %v51 = vld [vmem:[#allocation2 + $0x48] sm:$0xff]
    %v52 = vld [vmem:[#allocation2 + $0x50] sm:$0xff]
    %v53 = vld [vmem:[#allocation2 + $0x58] sm:$0xff]
    %v54 = vld [vmem:[#allocation2 + $0x60] sm:$0xff]
    %v55 = vld [vmem:[#allocation2 + $0x68] sm:$0xff]
    %v56 = vld [vmem:[#allocation2 + $0x70] sm:$0xff]
    %v57 = vld [vmem:[#allocation2 + $0x78] sm:$0xff]
    %v58 = vld [vmem:[#allocation2 + $0x80] sm:$0xff]
    %v59 = vld [vmem:[#allocation2 + $0x88] sm:$0xff]
    %v60 = vld [vmem:[#allocation2 + $0x90] sm:$0xff]
    %v61 = vld [vmem:[#allocation2 + $0x98] sm:$0xff]
    %v62 = vld [vmem:[#allocation2 + $0xa0] sm:$0xff]
    %v63 = vld [vmem:[#allocation2 + $0xa8] sm:$0xff]
    %v64 = vld [vmem:[#allocation2 + $0xb0] sm:$0xff]
    %v65 = vld [vmem:[#allocation2 + $0xb8] sm:$0xff]
    %v66 = vld [vmem:[#allocation2 + $0xc0] sm:$0xff]
    %v67 = vld [vmem:[#allocation2 + $0xc8] sm:$0xff]
    %v68 = vld [vmem:[#allocation2 + $0xd0] sm:$0xff]
    %v69 = vld [vmem:[#allocation2 + $0xd8] sm:$0xff]
    %v70 = vld [vmem:[#allocation2 + $0xe0] sm:$0xff]
    %v71 = vld [vmem:[#allocation2 + $0xe8] sm:$0xff]
    %v72 = vld [vmem:[#allocation2 + $0xf0] sm:$0xff]
    %v73 = vld [vmem:[#allocation2 + $0xf8] sm:$0xff]
    %v74 = vld [vmem:[#allocation2 + $0x100] sm:$0xff]
    %v75 = vld [vmem:[#allocation2 + $0x108] sm:$0xff]
    %v76 = vld [vmem:[#allocation2 + $0x110] sm:$0xff]
    %v77 = vld [vmem:[#allocation2 + $0x118] sm:$0xff]
    %v78 = vld [vmem:[#allocation2 + $0x120] sm:$0xff]
    %v79 = vld [vmem:[#allocation2 + $0x128] sm:$0xff]
    %v80 = vld [vmem:[#allocation2 + $0x130] sm:$0xff]
    %v81 = vld [vmem:[#allocation2 + $0x138] sm:$0xff]
    %v82 = vld [vmem:[#allocation2 + $0x140] sm:$0xff]
    %v83 = vld [vmem:[#allocation2 + $0x148] sm:$0xff]
    %v84 = vld [vmem:[#allocation2 + $0x150] sm:$0xff]
    %v85 = vld [vmem:[#allocation2 + $0x158] sm:$0xff]
    %v86 = vld [vmem:[#allocation2 + $0x160] sm:$0xff]
    %v87 = vld [vmem:[#allocation2 + $0x168] sm:$0xff]
    %v88 = vld [vmem:[#allocation2 + $0x170] sm:$0xff]
    %v89 = vld [vmem:[#allocation2 + $0x178] sm:$0xff]
    %v90 = vld [vmem:[#allocation2 + $0x180] sm:$0xff]
    %v91 = vld [vmem:[#allocation2 + $0x188] sm:$0xff]
    %v92 = vld [vmem:[#allocation2 + $0x190] sm:$0xff]
    %v93 = vld [vmem:[#allocation2 + $0x198] sm:$0xff]
    %v94 = vld [vmem:[#allocation2 + $0x1a0] sm:$0xff]
    %v95 = vld [vmem:[#allocation2 + $0x1a8] sm:$0xff]
    %v96 = vld [vmem:[#allocation2 + $0x1b0] sm:$0xff]
    %v97 = vld [vmem:[#allocation2 + $0x1b8] sm:$0xff]
    %v98 = vld [vmem:[#allocation2 + $0x1c0] sm:$0xff]
    %v99 = vld [vmem:[#allocation2 + $0x1c8] sm:$0xff]
    %v100 = vld [vmem:[#allocation2 + $0x1d0] sm:$0xff]
    %v101 = vld [vmem:[#allocation2 + $0x1d8] sm:$0xff]
    %v102 = vld [vmem:[#allocation2 + $0x1e0] sm:$0xff]
    %v103 = vld [vmem:[#allocation2 + $0x1e8] sm:$0xff]
    %v104 = vld [vmem:[#allocation2 + $0x1f0] sm:$0xff]
    %v105 = vld [vmem:[#allocation2 + $0x1f8] sm:$0xff]
    %v106 = vld [vmem:[#allocation2 + $0x200] sm:$0xff]
    %v107 = vld [vmem:[#allocation2 + $0x208] sm:$0xff]
    %v108 = vld [vmem:[#allocation2 + $0x210] sm:$0xff]
    %v109 = vld [vmem:[#allocation2 + $0x218] sm:$0xff]
    %v110 = vld [vmem:[#allocation2 + $0x220] sm:$0xff]
    %v111 = vld [vmem:[#allocation2 + $0x228] sm:$0xff]
    %v112 = vld [vmem:[#allocation2 + $0x230] sm:$0xff]
    %v113 = vld [vmem:[#allocation2 + $0x238] sm:$0xff]
    %v114 = vld [vmem:[#allocation2 + $0x240] sm:$0xff]
    %v115 = vld [vmem:[#allocation2 + $0x248] sm:$0xff]
    %v116 = vld [vmem:[#allocation2 + $0x250] sm:$0xff]
    %v117 = vld [vmem:[#allocation2 + $0x258] sm:$0xff]
    %v118 = vld [vmem:[#allocation2 + $0x260] sm:$0xff]
    %v119 = vld [vmem:[#allocation2 + $0x268] sm:$0xff]
    %v120 = vld [vmem:[#allocation2 + $0x270] sm:$0xff]
    %v121 = vld [vmem:[#allocation2 + $0x278] sm:$0xff]
    %v122 = vld [vmem:[#allocation2 + $0x280] sm:$0xff]
    %v123 = vld [vmem:[#allocation2 + $0x288] sm:$0xff]
    %v124 = vld [vmem:[#allocation2 + $0x290] sm:$0xff]
    %v125 = vld [vmem:[#allocation2 + $0x298] sm:$0xff]
    %v126 = vld [vmem:[#allocation2 + $0x2a0] sm:$0xff]
    %v127 = vld [vmem:[#allocation2 + $0x2a8] sm:$0xff]
    %v128 = vld [vmem:[#allocation2 + $0x2b0] sm:$0xff]
    %v129 = vld [vmem:[#allocation2 + $0x2b8] sm:$0xff]
    %v130 = vld [vmem:[#allocation2 + $0x2c0] sm:$0xff]
    %v131 = vld [vmem:[#allocation2 + $0x2c8] sm:$0xff]
    %v132 = vld [vmem:[#allocation2 + $0x2d0] sm:$0xff]
    %v133 = vld [vmem:[#allocation2 + $0x2d8] sm:$0xff]
    %v134 = vld [vmem:[#allocation2 + $0x2e0] sm:$0xff]
    %v135 = vld [vmem:[#allocation2 + $0x2e8] sm:$0xff]
    %v136 = vld [vmem:[#allocation2 + $0x2f0] sm:$0xff]
    %v137 = vld [vmem:[#allocation2 + $0x2f8] sm:$0xff]
    %v138 = vld [vmem:[#allocation2 + $0x300] sm:$0xff]
    %v139 = vld [vmem:[#allocation2 + $0x308] sm:$0xff]
    %v140 = vld [vmem:[#allocation2 + $0x310] sm:$0xff]
    %v141 = vld [vmem:[#allocation2 + $0x318] sm:$0xff]
    %v142 = vld [vmem:[#allocation2 + $0x320] sm:$0xff]
    %v143 = vld [vmem:[#allocation2 + $0x328] sm:$0xff]
    %v144 = vld [vmem:[#allocation2 + $0x330] sm:$0xff]
    %v145 = vld [vmem:[#allocation2 + $0x338] sm:$0xff]
    %v146 = vld [vmem:[#allocation2 + $0x340] sm:$0xff]
    %v147 = vld [vmem:[#allocation2 + $0x348] sm:$0xff]
    %v148 = vld [vmem:[#allocation2 + $0x350] sm:$0xff]
    %v149 = vld [vmem:[#allocation2 + $0x358] sm:$0xff]
    %v150 = vld [vmem:[#allocation2 + $0x360] sm:$0xff]
    %v151 = vld [vmem:[#allocation2 + $0x368] sm:$0xff]
    %v152 = vld [vmem:[#allocation2 + $0x370] sm:$0xff]
    %v153 = vld [vmem:[#allocation2 + $0x378] sm:$0xff]
    %v154 = vld [vmem:[#allocation2 + $0x380] sm:$0xff]
    %v155 = vld [vmem:[#allocation2 + $0x388] sm:$0xff]
    %v156 = vld [vmem:[#allocation2 + $0x390] sm:$0xff]
    %v157 = vld [vmem:[#allocation2 + $0x398] sm:$0xff]
    %v158 = vld [vmem:[#allocation2 + $0x3a0] sm:$0xff]
    %v159 = vld [vmem:[#allocation2 + $0x3a8] sm:$0xff]
    %v160 = vld [vmem:[#allocation2 + $0x3b0] sm:$0xff]
    %v161 = vld [vmem:[#allocation2 + $0x3b8] sm:$0xff]
    %v162 = vld [vmem:[#allocation2 + $0x3c0] sm:$0xff]
    %v163 = vld [vmem:[#allocation2 + $0x3c8] sm:$0xff]
    %v164 = vld [vmem:[#allocation2 + $0x3d0] sm:$0xff]
    %v165 = vld [vmem:[#allocation2 + $0x3d8] sm:$0xff]
    %v166 = vld [vmem:[#allocation2 + $0x3e0] sm:$0xff]
    %v167 = vld [vmem:[#allocation2 + $0x3e8] sm:$0xff]
    %v168 = vld [vmem:[#allocation2 + $0x3f0] sm:$0xff]
    %v169 = vld [vmem:[#allocation2 + $0x3f8] sm:$0xff]
    %v170 = vld [vmem:[%s2] sm:$0x1]
    %v172 = vlaneseq
    %v173 = vshrl.u32 %v172, 7
    %v174 = vsub.s32 0, %v173
    %v175 = vrot.slane %v170, %v174
    %v185 = vcombine.low %v34, %v36
    %v186 = vcombine.high %v34, %v36
    %v187 = vcombine.low %v38, %v40
    %v188 = vcombine.high %v38, %v40
    %v190 = vunpack.c.l.s4 1983009808
    %v191 = vunpack.c.0.s8 %v190
    %v192 = vlaneseq
    %v193 = vshrl.u32 %v192, 7
    %v194 = vsub.s32 %v191, %v193
    %v195 = vrot.slane %v185, %v194
    %v197 = vunpack.c.l.s4 1983009808
    %v198 = vunpack.c.0.s8 %v197
    %v199 = vlaneseq
    %v200 = vshrl.u32 %v199, 7
    %v201 = vsub.s32 %v198, %v200
    %v202 = vrot.slane %v186, %v201
    %v204 = vunpack.c.l.s4 1983009808
    %v205 = vunpack.c.0.s8 %v204
    %v206 = vlaneseq
    %v207 = vshrl.u32 %v206, 7
    %v208 = vsub.s32 %v205, %v207
    %v209 = vrot.slane %v187, %v208
    %v211 = vunpack.c.l.s4 1983009808
    %v212 = vunpack.c.0.s8 %v211
    %v213 = vlaneseq
    %v214 = vshrl.u32 %v213, 7
    %v215 = vsub.s32 %v212, %v214
    %v216 = vrot.slane %v188, %v215
    %v217 = vcombine.low %v195, %v209
    %v218 = vcombine.high %v195, %v209
    %v219 = vcombine.low %v202, %v216
    %v220 = vcombine.high %v202, %v216
    %v221 = vcombine.low %v35, %v37
    %v222 = vcombine.high %v35, %v37
    %v223 = vcombine.low %v39, %v41
    %v224 = vcombine.high %v39, %v41
    %v226 = vunpack.c.l.s4 1983009808
    %v227 = vunpack.c.0.s8 %v226
    %v228 = vlaneseq
    %v229 = vshrl.u32 %v228, 7
    %v230 = vsub.s32 %v227, %v229
    %v231 = vrot.slane %v221, %v230
    %v233 = vunpack.c.l.s4 1983009808
    %v234 = vunpack.c.0.s8 %v233
    %v235 = vlaneseq
    %v236 = vshrl.u32 %v235, 7
    %v237 = vsub.s32 %v234, %v236
    %v238 = vrot.slane %v222, %v237
    %v240 = vunpack.c.l.s4 1983009808
    %v241 = vunpack.c.0.s8 %v240
    %v242 = vlaneseq
    %v243 = vshrl.u32 %v242, 7
    %v244 = vsub.s32 %v241, %v243
    %v245 = vrot.slane %v223, %v244
    %v247 = vunpack.c.l.s4 1983009808
    %v248 = vunpack.c.0.s8 %v247
    %v249 = vlaneseq
    %v250 = vshrl.u32 %v249, 7
    %v251 = vsub.s32 %v248, %v250
    %v252 = vrot.slane %v224, %v251
    %v253 = vcombine.low %v231, %v245
    %v254 = vcombine.high %v231, %v245
    %v255 = vcombine.low %v238, %v252
    %v256 = vcombine.high %v238, %v252
    %265 = vmatprep.subr.mxu0 0.0
    %266 = vmatpush1.msra.mxu0 %v42
    %267 = vmatprep.subr.mxu0 0.0
    %268 = vmatpush1.msra.mxu0 %v43
    %269 = vmatprep.subr.mxu0 0.0
    %270 = vmatpush1.msra.mxu0 %v44
    %271 = vmatprep.subr.mxu0 0.0
    %272 = vmatpush1.msra.mxu0 %v45
    %273 = vmatprep.subr.mxu0 0.0
    %274 = vmatpush1.msra.mxu0 %v46
    %275 = vmatprep.subr.mxu0 0.0
    %276 = vmatpush1.msra.mxu0 %v47
    %277 = vmatprep.subr.mxu0 0.0
    %278 = vmatpush1.msra.mxu0 %v48
    %279 = vmatprep.subr.mxu0 0.0
    %280 = vmatpush1.msra.mxu0 %v49
    %281 = vmatprep.subr.mxu0 0.0
    %282 = vmatpush1.msra.mxu0 %v50
    %283 = vmatprep.subr.mxu0 0.0
    %284 = vmatpush1.msra.mxu0 %v51
    %285 = vmatprep.subr.mxu0 0.0
    %286 = vmatpush1.msra.mxu0 %v52
    %287 = vmatprep.subr.mxu0 0.0
    %288 = vmatpush1.msra.mxu0 %v53
    %289 = vmatprep.subr.mxu0 0.0
    %290 = vmatpush1.msra.mxu0 %v54
    %291 = vmatprep.subr.mxu0 0.0
    %292 = vmatpush1.msra.mxu0 %v55
    %293 = vmatprep.subr.mxu0 0.0
    %294 = vmatpush1.msra.mxu0 %v56
    %295 = vmatprep.subr.mxu0 0.0
    %296 = vmatpush1.msra.mxu0 %v57
    %297 = vmatprep.subr.mxu0 0.0
    %298 = vmatpush1.msra.mxu0 %v58
    %299 = vmatprep.subr.mxu0 0.0
    %300 = vmatpush1.msra.mxu0 %v59
    %301 = vmatprep.subr.mxu0 0.0
    %302 = vmatpush1.msra.mxu0 %v60
    %303 = vmatprep.subr.mxu0 0.0
    %304 = vmatpush1.msra.mxu0 %v61
    %305 = vmatprep.subr.mxu0 0.0
    %306 = vmatpush1.msra.mxu0 %v62
    %307 = vmatprep.subr.mxu0 0.0
    %308 = vmatpush1.msra.mxu0 %v63
    %309 = vmatprep.subr.mxu0 0.0
    %310 = vmatpush1.msra.mxu0 %v64
    %311 = vmatprep.subr.mxu0 0.0
    %312 = vmatpush1.msra.mxu0 %v65
    %313 = vmatprep.subr.mxu0 0.0
    %314 = vmatpush1.msra.mxu0 %v66
    %315 = vmatprep.subr.mxu0 0.0
    %316 = vmatpush1.msra.mxu0 %v67
    %317 = vmatprep.subr.mxu0 0.0
    %318 = vmatpush1.msra.mxu0 %v68
    %319 = vmatprep.subr.mxu0 0.0
    %320 = vmatpush1.msra.mxu0 %v69
    %321 = vmatprep.subr.mxu0 0.0
    %322 = vmatpush1.msra.mxu0 %v70
    %323 = vmatprep.subr.mxu0 0.0
    %324 = vmatpush1.msra.mxu0 %v71
    %325 = vmatprep.subr.mxu0 0.0
    %326 = vmatpush1.msra.mxu0 %v72
    %327 = vmatprep.subr.mxu0 0.0
    %328 = vmatpush1.msra.mxu0 %v73
    %329 = vmatprep.mubr.f32.mxu0 %v218
    %330 = vmatmul.mubr.f32.gmra.mrb[0].mxu0 %v217
    %v331 = vpop.f32.mrb[0].mxu0
    %v332 = vadd.f32 %v175, %v331
    %v333 = vpop.f32.mrb[0].mxu0
    %334 = vdwg.mxu0
    %335 = vmatprep.subr.mxu0 0.0
    %336 = vmatpush1.msra.mxu0 %v74
    %337 = vmatprep.subr.mxu0 0.0
    %338 = vmatpush1.msra.mxu0 %v75
    %339 = vmatprep.subr.mxu0 0.0
    %340 = vmatpush1.msra.mxu0 %v76
    %341 = vmatprep.subr.mxu0 0.0
    %342 = vmatpush1.msra.mxu0 %v77
    %343 = vmatprep.subr.mxu0 0.0
    %344 = vmatpush1.msra.mxu0 %v78
    %345 = vmatprep.subr.mxu0 0.0
    %346 = vmatpush1.msra.mxu0 %v79
    %347 = vmatprep.subr.mxu0 0.0
    %348 = vmatpush1.msra.mxu0 %v80
    %349 = vmatprep.subr.mxu0 0.0
    %350 = vmatpush1.msra.mxu0 %v81
    %351 = vmatprep.subr.mxu0 0.0
    %352 = vmatpush1.msra.mxu0 %v82
    %353 = vmatprep.subr.mxu0 0.0
    %354 = vmatpush1.msra.mxu0 %v83
    %355 = vmatprep.subr.mxu0 0.0
    %356 = vmatpush1.msra.mxu0 %v84
    %357 = vmatprep.subr.mxu0 0.0
    %358 = vmatpush1.msra.mxu0 %v85
    %359 = vmatprep.subr.mxu0 0.0
    %360 = vmatpush1.msra.mxu0 %v86
    %361 = vmatprep.subr.mxu0 0.0
    %362 = vmatpush1.msra.mxu0 %v87
    %363 = vmatprep.subr.mxu0 0.0
    %364 = vmatpush1.msra.mxu0 %v88
    %365 = vmatprep.subr.mxu0 0.0
    %366 = vmatpush1.msra.mxu0 %v89
    %367 = vmatprep.subr.mxu0 0.0
    %368 = vmatpush1.msra.mxu0 %v90
    %369 = vmatprep.subr.mxu0 0.0
    %370 = vmatpush1.msra.mxu0 %v91
    %371 = vmatprep.subr.mxu0 0.0
    %372 = vmatpush1.msra.mxu0 %v92
    %373 = vmatprep.subr.mxu0 0.0
    %374 = vmatpush1.msra.mxu0 %v93
    %375 = vmatprep.subr.mxu0 0.0
    %376 = vmatpush1.msra.mxu0 %v94
    %377 = vmatprep.subr.mxu0 0.0
    %378 = vmatpush1.msra.mxu0 %v95
    %379 = vmatprep.subr.mxu0 0.0
    %380 = vmatpush1.msra.mxu0 %v96
    %381 = vmatprep.subr.mxu0 0.0
    %382 = vmatpush1.msra.mxu0 %v97
    %383 = vmatprep.subr.mxu0 0.0
    %384 = vmatpush1.msra.mxu0 %v98
    %385 = vmatprep.subr.mxu0 0.0
    %386 = vmatpush1.msra.mxu0 %v99
    %387 = vmatprep.subr.mxu0 0.0
    %388 = vmatpush1.msra.mxu0 %v100
    %389 = vmatprep.subr.mxu0 0.0
    %390 = vmatpush1.msra.mxu0 %v101
    %391 = vmatprep.subr.mxu0 0.0
    %392 = vmatpush1.msra.mxu0 %v102
    %393 = vmatprep.subr.mxu0 0.0
    %394 = vmatpush1.msra.mxu0 %v103
    %395 = vmatprep.subr.mxu0 0.0
    %396 = vmatpush1.msra.mxu0 %v104
    %397 = vmatprep.subr.mxu0 0.0
    %398 = vmatpush1.msra.mxu0 %v105
    %399 = vmatprep.mubr.f32.mxu0 %v220
    %400 = vmatmul.mubr.f32.gmra.mrb[0].mxu0 %v219
    %v401 = vpop.f32.mrb[0].mxu0
    %v402 = vadd.f32 %v332, %v401
    %v403 = vpop.f32.mrb[0].mxu0
    %404 = vdwg.mxu0
    %405 = vmatprep.subr.mxu0 0.0
    %406 = vmatpush1.msra.mxu0 %v106
    %407 = vmatprep.subr.mxu0 0.0
    %408 = vmatpush1.msra.mxu0 %v107
    %409 = vmatprep.subr.mxu0 0.0
    %410 = vmatpush1.msra.mxu0 %v108
    %411 = vmatprep.subr.mxu0 0.0
    %412 = vmatpush1.msra.mxu0 %v109
    %413 = vmatprep.subr.mxu0 0.0
    %414 = vmatpush1.msra.mxu0 %v110
    %415 = vmatprep.subr.mxu0 0.0
    %416 = vmatpush1.msra.mxu0 %v111
    %417 = vmatprep.subr.mxu0 0.0
    %418 = vmatpush1.msra.mxu0 %v112
    %419 = vmatprep.subr.mxu0 0.0
    %420 = vmatpush1.msra.mxu0 %v113
    %421 = vmatprep.subr.mxu0 0.0
    %422 = vmatpush1.msra.mxu0 %v114
    %423 = vmatprep.subr.mxu0 0.0
    %424 = vmatpush1.msra.mxu0 %v115
    %425 = vmatprep.subr.mxu0 0.0
    %426 = vmatpush1.msra.mxu0 %v116
    %427 = vmatprep.subr.mxu0 0.0
    %428 = vmatpush1.msra.mxu0 %v117
    %429 = vmatprep.subr.mxu0 0.0
    %430 = vmatpush1.msra.mxu0 %v118
    %431 = vmatprep.subr.mxu0 0.0
    %432 = vmatpush1.msra.mxu0 %v119
    %433 = vmatprep.subr.mxu0 0.0
    %434 = vmatpush1.msra.mxu0 %v120
    %435 = vmatprep.subr.mxu0 0.0
    %436 = vmatpush1.msra.mxu0 %v121
    %437 = vmatprep.subr.mxu0 0.0
    %438 = vmatpush1.msra.mxu0 %v122
    %439 = vmatprep.subr.mxu0 0.0
    %440 = vmatpush1.msra.mxu0 %v123
    %441 = vmatprep.subr.mxu0 0.0
    %442 = vmatpush1.msra.mxu0 %v124
    %443 = vmatprep.subr.mxu0 0.0
    %444 = vmatpush1.msra.mxu0 %v125
    %445 = vmatprep.subr.mxu0 0.0
    %446 = vmatpush1.msra.mxu0 %v126
    %447 = vmatprep.subr.mxu0 0.0
    %448 = vmatpush1.msra.mxu0 %v127
    %449 = vmatprep.subr.mxu0 0.0
    %450 = vmatpush1.msra.mxu0 %v128
    %451 = vmatprep.subr.mxu0 0.0
    %452 = vmatpush1.msra.mxu0 %v129
    %453 = vmatprep.subr.mxu0 0.0
    %454 = vmatpush1.msra.mxu0 %v130
    %455 = vmatprep.subr.mxu0 0.0
    %456 = vmatpush1.msra.mxu0 %v131
    %457 = vmatprep.subr.mxu0 0.0
    %458 = vmatpush1.msra.mxu0 %v132
    %459 = vmatprep.subr.mxu0 0.0
    %460 = vmatpush1.msra.mxu0 %v133
    %461 = vmatprep.subr.mxu0 0.0
    %462 = vmatpush1.msra.mxu0 %v134
    %463 = vmatprep.subr.mxu0 0.0
    %464 = vmatpush1.msra.mxu0 %v135
    %465 = vmatprep.subr.mxu0 0.0
    %466 = vmatpush1.msra.mxu0 %v136
    %467 = vmatprep.subr.mxu0 0.0
    %468 = vmatpush1.msra.mxu0 %v137
    %469 = vmatprep.mubr.f32.mxu0 %v254
    %470 = vmatmul.mubr.f32.gmra.mrb[0].mxu0 %v253
    %v471 = vpop.f32.mrb[0].mxu0
    %v472 = vadd.f32 %v402, %v471
    %v473 = vpop.f32.mrb[0].mxu0
    %474 = vdwg.mxu0
    %475 = vmatprep.subr.mxu0 0.0
    %476 = vmatpush1.msra.mxu0 %v138
    %477 = vmatprep.subr.mxu0 0.0
    %478 = vmatpush1.msra.mxu0 %v139
    %479 = vmatprep.subr.mxu0 0.0
    %480 = vmatpush1.msra.mxu0 %v140
    %481 = vmatprep.subr.mxu0 0.0
    %482 = vmatpush1.msra.mxu0 %v141
    %483 = vmatprep.subr.mxu0 0.0
    %484 = vmatpush1.msra.mxu0 %v142
    %485 = vmatprep.subr.mxu0 0.0
    %486 = vmatpush1.msra.mxu0 %v143
    %487 = vmatprep.subr.mxu0 0.0
    %488 = vmatpush1.msra.mxu0 %v144
    %489 = vmatprep.subr.mxu0 0.0
    %490 = vmatpush1.msra.mxu0 %v145
    %491 = vmatprep.subr.mxu0 0.0
    %492 = vmatpush1.msra.mxu0 %v146
    %493 = vmatprep.subr.mxu0 0.0
    %494 = vmatpush1.msra.mxu0 %v147
    %495 = vmatprep.subr.mxu0 0.0
    %496 = vmatpush1.msra.mxu0 %v148
    %497 = vmatprep.subr.mxu0 0.0
    %498 = vmatpush1.msra.mxu0 %v149
    %499 = vmatprep.subr.mxu0 0.0
    %500 = vmatpush1.msra.mxu0 %v150
    %501 = vmatprep.subr.mxu0 0.0
    %502 = vmatpush1.msra.mxu0 %v151
    %503 = vmatprep.subr.mxu0 0.0
    %504 = vmatpush1.msra.mxu0 %v152
    %505 = vmatprep.subr.mxu0 0.0
    %506 = vmatpush1.msra.mxu0 %v153
    %507 = vmatprep.subr.mxu0 0.0
    %508 = vmatpush1.msra.mxu0 %v154
    %509 = vmatprep.subr.mxu0 0.0
    %510 = vmatpush1.msra.mxu0 %v155
    %511 = vmatprep.subr.mxu0 0.0
    %512 = vmatpush1.msra.mxu0 %v156
    %513 = vmatprep.subr.mxu0 0.0
    %514 = vmatpush1.msra.mxu0 %v157
    %515 = vmatprep.subr.mxu0 0.0
    %516 = vmatpush1.msra.mxu0 %v158
    %517 = vmatprep.subr.mxu0 0.0
    %518 = vmatpush1.msra.mxu0 %v159
    %519 = vmatprep.subr.mxu0 0.0
    %520 = vmatpush1.msra.mxu0 %v160
    %521 = vmatprep.subr.mxu0 0.0
    %522 = vmatpush1.msra.mxu0 %v161
    %523 = vmatprep.subr.mxu0 0.0
    %524 = vmatpush1.msra.mxu0 %v162
    %525 = vmatprep.subr.mxu0 0.0
    %526 = vmatpush1.msra.mxu0 %v163
    %527 = vmatprep.subr.mxu0 0.0
    %528 = vmatpush1.msra.mxu0 %v164
    %529 = vmatprep.subr.mxu0 0.0
    %530 = vmatpush1.msra.mxu0 %v165
    %531 = vmatprep.subr.mxu0 0.0
    %532 = vmatpush1.msra.mxu0 %v166
    %533 = vmatprep.subr.mxu0 0.0
    %534 = vmatpush1.msra.mxu0 %v167
    %535 = vmatprep.subr.mxu0 0.0
    %536 = vmatpush1.msra.mxu0 %v168
    %537 = vmatprep.subr.mxu0 0.0
    %538 = vmatpush1.msra.mxu0 %v169
    %539 = vmatprep.mubr.f32.mxu0 %v256
    %540 = vmatmul.mubr.f32.gmra.mrb[0].mxu0 %v255
    %v541 = vpop.f32.mrb[0].mxu0
    %v542 = vadd.f32 %v472, %v541
    %v543 = vpop.f32.mrb[0].mxu0
    %544 = vdwg.mxu0
    %546 = vrot.lane.b32.xlu0 %v542, 32
    %v547 = vpop.permute.xlu0 %546
    %v549 = vmax.f32 %v542, %v547
    %550 = vrot.lane.b32.xlu0 %v542, 64
    %v551 = vpop.permute.xlu0 %550
    %v553 = vmax.f32 %v549, %v551
    %554 = vrot.lane.b32.xlu0 %v542, 96
    %v555 = vpop.permute.xlu0 %554
    %v557 = vmax.f32 %v553, %v555
    %v558 = vld [vmem:[%s3] sm:$0xff]
    %v559 = vld [vmem:[%s3 + $0x8] sm:$0xff]
    %v560 = vld [vmem:[%s3 + $0x10] sm:$0xff]
    %v561 = vld [vmem:[%s3 + $0x18] sm:$0xff]
    %v562 = vld [vmem:[%s3 + $0x20] sm:$0xff]
    %v563 = vld [vmem:[%s3 + $0x28] sm:$0xff]
    %v564 = vld [vmem:[%s3 + $0x30] sm:$0xff]
    %v565 = vld [vmem:[%s3 + $0x38] sm:$0xff]
    %v566 = vld [vmem:[%s3 + $0x40] sm:$0xff]
    %v567 = vld [vmem:[%s3 + $0x48] sm:$0xff]
    %v568 = vld [vmem:[%s3 + $0x50] sm:$0xff]
    %v569 = vld [vmem:[%s3 + $0x58] sm:$0xff]
    %v570 = vld [vmem:[%s3 + $0x60] sm:$0xff]
    %v571 = vld [vmem:[%s3 + $0x68] sm:$0xff]
    %v572 = vld [vmem:[%s3 + $0x70] sm:$0xff]
    %v573 = vld [vmem:[%s3 + $0x78] sm:$0xff]
    %v574 = vld [vmem:[%s4] sm:$0x1]
    %v576 = vlaneseq
    %v577 = vshrl.u32 %v576, 7
    %v578 = vsub.s32 0, %v577
    %v579 = vrot.slane %v574, %v578
    %581 = vmatprep.subr.mxu0 0.0
    %582 = vmatpush1.msra.mxu0 %v558
    %583 = vmatprep.subr.mxu0 0.0
    %584 = vmatpush1.msra.mxu0 %v559
    %585 = vmatprep.subr.mxu0 0.0
    %586 = vmatpush1.msra.mxu0 %v560
    %587 = vmatprep.subr.mxu0 0.0
    %588 = vmatpush1.msra.mxu0 %v561
    %589 = vmatprep.subr.mxu0 0.0
    %590 = vmatpush1.msra.mxu0 %v562
    %591 = vmatprep.subr.mxu0 0.0
    %592 = vmatpush1.msra.mxu0 %v563
    %593 = vmatprep.subr.mxu0 0.0
    %594 = vmatpush1.msra.mxu0 %v564
    %595 = vmatprep.subr.mxu0 0.0
    %596 = vmatpush1.msra.mxu0 %v565
    %597 = vmatprep.subr.mxu0 0.0
    %598 = vmatpush1.msra.mxu0 %v566
    %599 = vmatprep.subr.mxu0 0.0
    %600 = vmatpush1.msra.mxu0 %v567
    %601 = vmatprep.subr.mxu0 0.0
    %602 = vmatpush1.msra.mxu0 %v568
    %603 = vmatprep.subr.mxu0 0.0
    %604 = vmatpush1.msra.mxu0 %v569
    %605 = vmatprep.subr.mxu0 0.0
    %606 = vmatpush1.msra.mxu0 %v570
    %607 = vmatprep.subr.mxu0 0.0
    %608 = vmatpush1.msra.mxu0 %v571
    %609 = vmatprep.subr.mxu0 0.0
    %610 = vmatpush1.msra.mxu0 %v572
    %611 = vmatprep.subr.mxu0 0.0
    %612 = vmatpush1.msra.mxu0 %v573
    %613 = vmatprep.subr.mxu0 0.0
    %614 = vmatpush1.msra.mxu0 0.0
    %615 = vmatprep.subr.mxu0 0.0
    %616 = vmatpush1.msra.mxu0 0.0
    %617 = vmatprep.subr.mxu0 0.0
    %618 = vmatpush1.msra.mxu0 0.0
    %619 = vmatprep.subr.mxu0 0.0
    %620 = vmatpush1.msra.mxu0 0.0
    %621 = vmatprep.subr.mxu0 0.0
    %622 = vmatpush1.msra.mxu0 0.0
    %623 = vmatprep.subr.mxu0 0.0
    %624 = vmatpush1.msra.mxu0 0.0
    %625 = vmatprep.subr.mxu0 0.0
    %626 = vmatpush1.msra.mxu0 0.0
    %627 = vmatprep.subr.mxu0 0.0
    %628 = vmatpush1.msra.mxu0 0.0
    %629 = vmatprep.subr.mxu0 0.0
    %630 = vmatpush1.msra.mxu0 0.0
    %631 = vmatprep.subr.mxu0 0.0
    %632 = vmatpush1.msra.mxu0 0.0
    %633 = vmatprep.subr.mxu0 0.0
    %634 = vmatpush1.msra.mxu0 0.0
    %635 = vmatprep.subr.mxu0 0.0
    %636 = vmatpush1.msra.mxu0 0.0
    %637 = vmatprep.subr.mxu0 0.0
    %638 = vmatpush1.msra.mxu0 0.0
    %639 = vmatprep.subr.mxu0 0.0
    %640 = vmatpush1.msra.mxu0 0.0
    %641 = vmatprep.subr.mxu0 0.0
    %642 = vmatpush1.msra.mxu0 0.0
    %643 = vmatprep.subr.mxu0 0.0
    %644 = vmatpush1.msra.mxu0 0.0
    %645 = vmatprep.mubr.f32.mxu0 0.0
    %646 = vmatmul.mubr.f32.gmra.mrb[0].mxu0 %v557
    %v647 = vpop.f32.mrb[0].mxu0
    %v648 = vadd.f32 %v579, %v647
    %v649 = vpop.f32.mrb[0].mxu0
    %650 = vdwg.mxu0
    %v651 = vlaneseq
    %v652 = vand.u32 %v651, 127
    %vm653 = vcmp.lt.s32.totalorder %v652, 16
    %v654 = vmul.f32 %v648, 1.442695
    %v655 = vpow.pop %v654
    %v656 = vsel %vm653, %v648, %v655
    %657 = vst [vmem:[#allocation4] sm:$0xff] %v656
    // Predicated region
    $region26: #{inference_network_forward.1} parent=1 // pred_check
      _
    $region27: #{inference_network_forward.1} parent=1 // pred_check_branch
      %659 = sbr.rel (0) target = $region29
    $region28: #{inference_network_forward.1} parent=1 // pred_region
      // Predicated region
      $region30: #{inference_network_forward.1} parent=28 // pred_check
        _
      $region31: #{inference_network_forward.1} parent=28 // pred_check_branch
        %661 = sbr.rel (0) target = $region33
      $region32: #{inference_network_forward.1} parent=28 // pred_region
        // Predicated region
        $region34: #{inference_network_forward.1} parent=32 // pred_check
          _
        $region35: #{inference_network_forward.1} parent=32 // pred_check_branch
          %663 = sbr.rel target = $region37
        $region36: #{inference_network_forward.1} parent=32 // pred_region
          // Predicated region
          $region49: #{inference_network_forward.1} parent=36 // pred_check
            _
          $region50: #{inference_network_forward.1} parent=36 // pred_check_branch
            %678 = sbr.rel (0) target = $region52
          $region51: #{inference_network_forward.1} parent=36 // pred_region
            loop: start=0, step=1, limit=1
            $region53: #{inference_network_forward.1} parent=51 // loop_pre_header
              _
            $region54: #{inference_network_forward.1} parent=51 // loop_header
              %s681 = sphi 0, %s685
              %p682 = scmp.ge.s32.totalorder %s681, 1
              %s686 = sphi [#allocation4], [#allocation4]
              %s687 = sphi %s5, %s5
            $region55: #{inference_network_forward.1} parent=51 // loop_header_branch
              %684 = sbr.rel (%p682) target = $region59
            $region56: #{inference_network_forward.1} parent=51 // loop_body
              %v688 = vld [vmem:[%s686] sm:$0x3]
              %689 = vst [vmem:[%s687] sm:$0x3] %v688
            $region57: #{inference_network_forward.1} parent=51 // loop_footer
              %s685 = sadd.s32 1, %s681
            $region58: #{inference_network_forward.1} parent=51 // loop_footer_branch
              %680 = sbr.rel target = $region54
            $region59: #{inference_network_forward.1} parent=51 // loop_exit
              _
          $region52: #{inference_network_forward.1} parent=36 // pred_fallthru
            _
        $region37: #{inference_network_forward.1} parent=32 // pred_fallthru
          _
        // Predicated region
        $region38: #{inference_network_forward.1} parent=32 // pred_check
          _
        $region39: #{inference_network_forward.1} parent=32 // pred_check_branch
          %665 = sbr.rel (0) target = $region41
        $region40: #{inference_network_forward.1} parent=32 // pred_region
          loop: start=0, step=1, limit=1
          $region42: #{inference_network_forward.1} parent=40 // loop_pre_header
            _
          $region43: #{inference_network_forward.1} parent=40 // loop_header
            %s668 = sphi 0, %s672
            %p669 = scmp.ge.s32.totalorder %s668, 1
            %s673 = sphi [#allocation4], [#allocation4]
            %s674 = sphi %s5, %s5
          $region44: #{inference_network_forward.1} parent=40 // loop_header_branch
            %671 = sbr.rel (%p669) target = $region48
          $region45: #{inference_network_forward.1} parent=40 // loop_body
            %v675 = vld [vmem:[%s673] sm:$0x3]
            %676 = vst [vmem:[%s674] sm:$0x3] %v675
          $region46: #{inference_network_forward.1} parent=40 // loop_footer
            %s672 = sadd.s32 1, %s668
          $region47: #{inference_network_forward.1} parent=40 // loop_footer_branch
            %667 = sbr.rel target = $region43
          $region48: #{inference_network_forward.1} parent=40 // loop_exit
            _
        $region41: #{inference_network_forward.1} parent=32 // pred_fallthru
          _
      $region33: #{inference_network_forward.1} parent=28 // pred_fallthru
        _
      %690 = vnop
    $region29: #{inference_network_forward.1} parent=1 // pred_fallthru
      _
    // Predicated region
    $region60: #{inference_network_forward.1} parent=1 // pred_check
      _
    $region61: #{inference_network_forward.1} parent=1 // pred_check_branch
      %692 = sbr.rel (0) target = $region63
    $region62: #{inference_network_forward.1} parent=1 // pred_region
      _
    $region63: #{inference_network_forward.1} parent=1 // pred_fallthru
      _
    %693 = vsyncpa [#allocation3], 1

</llo_original>
